<compile_context>
chip_gen: v7x
topology: tpu7x:2x2x1
jax: 0.10.0
libtpu: 0.0.40
codegen_flags: <defaults>
</compile_context>

<pallas_src>
import functools

import jax
import jax.numpy as jnp
from jax import lax
from jax.experimental import pallas as pl
from jax.experimental.pallas import tpu as pltpu


def _grconv_kernel(patches_ref, wcomb_ref, wf_ref, bf_ref, pooled_ref, out_ref):
    # patches_ref: (1, KD, HW) bf16   -- im2col columns for this batch element
    # wcomb_ref  : (C_out, KD) bf16   -- [w3 | w1] / 3, row-major over (kh,kw,c)
    # wf_ref     : (C_out, C_in) bf16 -- fc weight / 3
    # bf_ref     : (C_out, 1) f32     -- fc bias / 3
    # pooled_ref : (1, C_in, 1) bf16  -- global-avg-pooled input (column)
    # out_ref    : (1, C_out, HW) f32 -- lane-dense output block

    # z3 + z1 in a single MXU matmul, output already (C_out, HW) lane-dense.
    acc = jnp.dot(wcomb_ref[...], patches_ref[0],
                  preferred_element_type=jnp.float32)            # (C_out, HW)

    # zf: fc(pooled) -> ReLU, as a (C_out, 1) column (1/3 already folded in;
    # relu(x/3) == relu(x)/3 so folding before the ReLU is exact).
    zf = jnp.dot(wf_ref[...], pooled_ref[0],
                 preferred_element_type=jnp.float32) + bf_ref[...]  # (C_out, 1)
    zf = jnp.maximum(zf, 0.0)

    # Broadcast-add over the lane axis and store lane-dense.
    out_ref[0] = (acc + zf).astype(out_ref.dtype)


def grconv_forward(x_nchw, w3_oihw, w1_oihw, wf, bf, *, kernel, stride, padding,
                   groups=1):
    """Grconv.forward.  x_nchw: (N, C_in, H, W) float32 -> (N, C_out, H_out, W_out)."""
    # TODO(synk): groups > 1 grouped conv not implemented (module default groups=1).
    assert groups == 1
    N, C_in, H, W = x_nchw.shape
    C_out = w3_oihw.shape[0]
    K, S, P = kernel, stride, padding
    H_out = (H + 2 * P - K) // S + 1
    W_out = (W + 2 * P - K) // S + 1
    HW = H_out * W_out
    # z1 (1x1, stride S, no pad) output must match z3 output for the sum.
    assert (H - 1) // S + 1 == H_out and (W - 1) // S + 1 == W_out

    x_f32 = x_nchw.astype(jnp.float32)

    # --- wrapper glue: im2col directly from NCHW (row order = (kh, kw, c)) ---
    xpad = jnp.pad(x_f32, ((0, 0), (0, 0), (P, P), (P, P)))
    cols = []
    for kh in range(K):
        for kw in range(K):
            patch = xpad[:, :, kh:kh + (H_out - 1) * S + 1:S,
                               kw:kw + (W_out - 1) * S + 1:S]     # (N, Cin, Ho, Wo)
            cols.append(patch.reshape(N, C_in, HW))
    # 1x1-conv input (stride-S downsample of the unpadded input) as extra rows.
    cols.append(x_f32[:, :, ::S, ::S].reshape(N, C_in, HW))
    patches = jnp.concatenate(cols, axis=1).astype(jnp.bfloat16)  # (N, KD, HW)
    KD = (K * K + 1) * C_in

    # --- weights: fold the constant softmax(ones) == 1/3 mixing weight -------
    third = jnp.float32(1.0 / 3.0)
    w3_mat = jnp.transpose(w3_oihw, (0, 2, 3, 1)).reshape(C_out, K * K * C_in)
    w1_mat = w1_oihw[:, :, 0, 0]                                  # (C_out, C_in)
    wcomb = (jnp.concatenate([w3_mat, w1_mat], axis=1) * third).astype(jnp.bfloat16)
    wf_s = (wf.astype(jnp.float32) * third).astype(jnp.bfloat16)  # (C_out, C_in)
    bf_col = (bf.astype(jnp.float32) * third).reshape(C_out, 1)   # (C_out, 1) f32

    # --- global average pool in the wrapper (XLA fuses it trivially) ---------
    pooled = jnp.mean(x_f32, axis=(2, 3)).reshape(N, C_in, 1).astype(jnp.bfloat16)

    out_flat = pl.pallas_call(
        _grconv_kernel,
        out_shape=jax.ShapeDtypeStruct((N, C_out, HW), jnp.float32),
        grid=(N,),
        in_specs=[
            pl.BlockSpec((1, KD, HW), lambda n: (n, 0, 0)),       # patches
            pl.BlockSpec((C_out, KD), lambda n: (0, 0)),          # combined conv W
            pl.BlockSpec((C_out, C_in), lambda n: (0, 0)),        # fc weight
            pl.BlockSpec((C_out, 1), lambda n: (0, 0)),           # fc bias (col)
            pl.BlockSpec((1, C_in, 1), lambda n: (n, 0, 0)),      # pooled (col)
        ],
        out_specs=pl.BlockSpec((1, C_out, HW), lambda n: (n, 0, 0)),
        compiler_params=pltpu.CompilerParams(
            dimension_semantics=("parallel",)),
    )(patches, wcomb, wf_s, bf_col, pooled)

    # (N, C_out, HW) -> (N, C_out, H_out, W_out): pure reshape, no transpose.
    return out_flat.reshape(N, C_out, H_out, W_out)


def grconv_reference(x_nchw, w3_oihw, w1_oihw, wf, bf, *, kernel, stride, padding):
    """Pure-JAX reference mirroring the PyTorch module (NCHW)."""
    S, P = stride, padding
    z3 = lax.conv_general_dilated(x_nchw, w3_oihw, (S, S), [(P, P), (P, P)])
    z1 = lax.conv_general_dilated(x_nchw, w1_oihw, (S, S), "VALID")
    pooled = jnp.mean(x_nchw, axis=(2, 3))                     # (N, C_in)
    zf = jax.nn.relu(pooled @ wf.T + bf)[:, :, None, None]     # (N, C_out, 1, 1)
    p0 = p1 = p2 = 1.0 / 3.0                                   # softmax of equal ones
    return p0 * z3 + p1 * z1 + p2 * zf


if __name__ == "__main__":
    # Module config: Grconv(in_channel=4, out_channel=8, kernel_size=3, stride=1, padding=1)
    N, C_in, C_out, H, W = 2, 4, 8, 16, 16
    K, S, P = 3, 1, 1

    key = jax.random.PRNGKey(0)
    kx, k3, k1, kf, kb = jax.random.split(key, 5)
    x = jax.random.normal(kx, (N, C_in, H, W), jnp.float32)
    # Deterministic parameter init (shapes match nn.Conv2d / nn.Linear).
    w3 = 0.1 * jax.random.normal(k3, (C_out, C_in, K, K), jnp.float32)   # z3 weight
    w1 = 0.1 * jax.random.normal(k1, (C_out, C_in, 1, 1), jnp.float32)   # z1 weight
    wf = 0.1 * jax.random.normal(kf, (C_out, C_in), jnp.float32)         # fc1 weight
    bf = 0.1 * jax.random.normal(kb, (C_out,), jnp.float32)              # fc1 bias

    out = grconv_forward(x, w3, w1, wf, bf, kernel=K, stride=S, padding=P)
    out = jax.block_until_ready(out)

    ref = grconv_reference(x, w3, w1, wf, bf, kernel=K, stride=S, padding=P)
    assert out.shape == (N, C_out, H, W), out.shape
    assert jnp.allclose(out, ref, rtol=2e-2, atol=2e-2), float(jnp.max(jnp.abs(out - ref)))

    print("KERNEL_OK")
</pallas_src>

<mosaic_0001>
module attributes {stable_mosaic.version = 11 : i64} {
  func.func @_grconv_kernel(%arg0: i32, %arg1: memref<1x40x256xbf16, #tpu.memory_space<vmem>>, %arg2: memref<8x40xbf16, #tpu.memory_space<vmem>>, %arg3: memref<8x4xbf16, #tpu.memory_space<vmem>>, %arg4: memref<8x1xf32, #tpu.memory_space<vmem>>, %arg5: memref<1x4x1xbf16, #tpu.memory_space<vmem>>, %arg6: memref<1x8x256xf32, #tpu.memory_space<vmem>>) attributes {dimension_semantics = [#tpu.dimension_semantics<parallel>], iteration_bounds = array<i64: 2>, scalar_prefetch = 0 : i64, scratch_operands = 0 : i64, tpu.core_type = #tpu.core_type<tc>, window_params = [{transform_indices = @transform_0, window_bounds = array<i64: 1, 40, 256>}, {pipeline_mode = #tpu.pipeline_mode<synchronous>, transform_indices = @transform_1, window_bounds = array<i64: 8, 40>}, {pipeline_mode = #tpu.pipeline_mode<synchronous>, transform_indices = @transform_2, window_bounds = array<i64: 8, 4>}, {pipeline_mode = #tpu.pipeline_mode<synchronous>, transform_indices = @transform_3, window_bounds = array<i64: 8, 1>}, {transform_indices = @transform_4, window_bounds = array<i64: 1, 4, 1>}, {transform_indices = @transform_5, window_bounds = array<i64: 1, 8, 256>}]} {
    %c0 = arith.constant 0 : index
    %c0_0 = arith.constant 0 : index
    %0 = vector.load %arg2[%c0, %c0_0] : memref<8x40xbf16, #tpu.memory_space<vmem>>, vector<8x40xbf16>
    %c0_1 = arith.constant 0 : index
    %c0_2 = arith.constant 0 : index
    %c0_3 = arith.constant 0 : index
    %1 = vector.load %arg1[%c0_1, %c0_2, %c0_3] : memref<1x40x256xbf16, #tpu.memory_space<vmem>>, vector<1x40x256xbf16>
    %2 = vector.shape_cast %1 : vector<1x40x256xbf16> to vector<40x256xbf16>
    %cst = arith.constant dense<0.000000e+00> : vector<8x256xf32>
    %3 = tpu.matmul %0, %2, %cst {dimension_numbers = #tpu.dot_dimension_numbers<[1], [0], [0], [1], [0, 0, 1, 1], [], []>} : vector<8x40xbf16>, vector<40x256xbf16>, vector<8x256xf32> -> vector<8x256xf32>
    %c0_4 = arith.constant 0 : index
    %c0_5 = arith.constant 0 : index
    %4 = vector.load %arg3[%c0_4, %c0_5] : memref<8x4xbf16, #tpu.memory_space<vmem>>, vector<8x4xbf16>
    %c0_6 = arith.constant 0 : index
    %c0_7 = arith.constant 0 : index
    %c0_8 = arith.constant 0 : index
    %5 = vector.load %arg5[%c0_6, %c0_7, %c0_8] : memref<1x4x1xbf16, #tpu.memory_space<vmem>>, vector<1x4x1xbf16>
    %6 = vector.shape_cast %5 : vector<1x4x1xbf16> to vector<4x1xbf16>
    %cst_9 = arith.constant dense<0.000000e+00> : vector<8x1xf32>
    %7 = tpu.matmul %4, %6, %cst_9 {dimension_numbers = #tpu.dot_dimension_numbers<[1], [0], [0], [1], [0, 0, 1, 1], [], []>} : vector<8x4xbf16>, vector<4x1xbf16>, vector<8x1xf32> -> vector<8x1xf32>
    %c0_10 = arith.constant 0 : index
    %c0_11 = arith.constant 0 : index
    %8 = vector.load %arg4[%c0_10, %c0_11] : memref<8x1xf32, #tpu.memory_space<vmem>>, vector<8x1xf32>
    %9 = arith.addf %7, %8 : vector<8x1xf32>
    %cst_12 = arith.constant 0.000000e+00 : f32
    %10 = vector.broadcast %cst_12 : f32 to vector<8x1xf32>
    %11 = arith.maximumf %9, %10 : vector<8x1xf32>
    %12 = vector.broadcast %11 : vector<8x1xf32> to vector<8x256xf32>
    %13 = arith.addf %3, %12 : vector<8x256xf32>
    %c0_13 = arith.constant 0 : index
    %c0_14 = arith.constant 0 : index
    %c0_15 = arith.constant 0 : index
    %14 = vector.load %arg6[%c0_13, %c0_14, %c0_15] : memref<1x8x256xf32, #tpu.memory_space<vmem>>, vector<1x8x256xf32>
    %15 = vector.shape_cast %14 : vector<1x8x256xf32> to vector<8x256xf32>
    %16 = vector.shape_cast %13 : vector<8x256xf32> to vector<1x8x256xf32>
    tpu.vector_store %arg6[%c0_13, %c0_14, %c0_15], %16 {strides = array<i32>} : memref<1x8x256xf32, #tpu.memory_space<vmem>>, vector<1x8x256xf32>,
    return
  }
  func.func @transform_0(%arg0: i32) -> (i32, i32, i32) {
    %c0_i32 = arith.constant 0 : i32
    %c0_i32_0 = arith.constant 0 : i32
    %c0_i32_1 = arith.constant 0 : i32
    return %arg0, %c0_i32, %c0_i32_0 : i32, i32, i32
  }
  func.func @transform_1(%arg0: i32) -> (i32, i32) {
    %c0_i32 = arith.constant 0 : i32
    %c0_i32_0 = arith.constant 0 : i32
    %c0_i32_1 = arith.constant 0 : i32
    return %c0_i32, %c0_i32_0 : i32, i32
  }
  func.func @transform_2(%arg0: i32) -> (i32, i32) {
    %c0_i32 = arith.constant 0 : i32
    %c0_i32_0 = arith.constant 0 : i32
    %c0_i32_1 = arith.constant 0 : i32
    return %c0_i32, %c0_i32_0 : i32, i32
  }
  func.func @transform_3(%arg0: i32) -> (i32, i32) {
    %c0_i32 = arith.constant 0 : i32
    %c0_i32_0 = arith.constant 0 : i32
    %c0_i32_1 = arith.constant 0 : i32
    return %c0_i32, %c0_i32_0 : i32, i32
  }
  func.func @transform_4(%arg0: i32) -> (i32, i32, i32) {
    %c0_i32 = arith.constant 0 : i32
    %c0_i32_0 = arith.constant 0 : i32
    %c0_i32_1 = arith.constant 0 : i32
    return %arg0, %c0_i32, %c0_i32_0 : i32, i32, i32
  }
  func.func @transform_5(%arg0: i32) -> (i32, i32, i32) {
    %c0_i32 = arith.constant 0 : i32
    %c0_i32_0 = arith.constant 0 : i32
    %c0_i32_1 = arith.constant 0 : i32
    return %arg0, %c0_i32, %c0_i32_0 : i32, i32, i32
  }
}

</mosaic_0001>

<llo_original>
// kernel: tpu_custom_call.1
$region0: #{tpu_custom_call.1}
  #allocation0 [shape = 'u32[]', space=smem, size = 0x4, offset = 0x4, fixed_abs, tag = 'smem constant byte address 0x4 - core index']
  #allocation1 [shape = 'u32[144,128]{1,0:T(1,128)}', space=vmem, size = 0x12000, scoped, tag = 'internal scratch']
  %s0 = inlined_call_operand.hbm [shape: bf16[2,40,256], index: 0, kind: input, shape index: {}]
  %s1 = inlined_call_operand.vmem [shape: bf16[8,40], index: 1, kind: input, shape index: {}]
  %s2 = inlined_call_operand.vmem [shape: bf16[8,4], index: 2, kind: input, shape index: {}]
  %s3 = inlined_call_operand.vmem [shape: f32[8,1], index: 3, kind: input, shape index: {}]
  %s4 = inlined_call_operand.vmem [shape: bf16[2,4,1], index: 4, kind: input, shape index: {}]
  %s5 = inlined_call_operand.hbm [shape: f32[2,8,256], index: 5, kind: output, shape index: {}]
  %s6 = sld [smem:[#allocation0]]
  $region57: #{tpu_custom_call.1} parent=0
    _
  %s8 = ssub.s32 1, %s6
  %s9 = scalar_select 0, %s8, %s6
  $region1: #{tpu_custom_call.1} parent=0
    #allocation2 [shape = 'u8[40960]{0}', space=vmem, size = 0xa000, scoped, tag = 'input window, operand 0']
    #allocation3 [shape = 's32[2]{0}', space=sflag, size = 0x8, scoped, tag = 'scoped memory for tpu_custom_call.1']
    #allocation4 [shape = 's32[2]{0}', space=sflag, size = 0x8, scoped, tag = 'scoped memory for tpu_custom_call.1']
    #allocation5 [shape = 'u8[16384]{0}', space=vmem, size = 0x4000, scoped, tag = 'output window, operand 0']
    %10 = vsyncpa [#allocation3], 0
    %s11 = scalar_lea.sflag [#allocation3], 1
    %12 = vsyncpa %s11, 0
    %13 = vsyncpa [#allocation4], 0
    %s14 = scalar_lea.sflag [#allocation4], 1
    %15 = vsyncpa %s14, 0
    loop: start=0, step=1, limit=4
    $region2: #{tpu_custom_call.1} parent=1 // loop_pre_header
      _
    $region3: #{tpu_custom_call.1} parent=1 // loop_header
      %s17 = sphi 0, %s21
      %p18 = scmp.ge.s32.totalorder %s17, 4
      %s27 = sphi 0, %s29
      %s30 = sphi 0, %s27
      %s31 = sphi 0, %s30
      %s47 = sphi 0, %s31
      %s51 = sphi 0, %s51
      %s53 = sphi 0, %s51
      %s54 = sphi 0, %s53
      %s68 = sphi 0, %s54
      %s72 = sphi 0, %s72
      %s74 = sphi 0, %s72
      %s75 = sphi 0, %s74
      %s89 = sphi 0, %s75
      %s93 = sphi 0, %s93
      %s95 = sphi 0, %s93
      %s96 = sphi 0, %s95
      %s110 = sphi 0, %s96
      %s116 = sphi 0, %s118
      %s119 = sphi 0, %s116
      %s120 = sphi 0, %s119
      %s136 = sphi 0, %s120
      %s142 = sphi 0, %s144
      %s145 = sphi 0, %s142
      %s146 = sphi 0, %s145
      %s162 = sphi 0, %s146
    $region4: #{tpu_custom_call.1} parent=1 // loop_header_branch
      %20 = sbr.rel (%p18) target = $region8
    $region5: #{tpu_custom_call.1} parent=1 // loop_body
      %s22 = ssub.s32 %s17, 1
      %s23 = ssub.s32 %s17, 2
      %s24 = sadd.s32 %s17, 1
      %s25 = ssub.s32 %s17, %s24
      %p26 = scmp.eq.s32.totalorder %s25, 0
      %s28 = sadd.s32 %s27, 1
      %s29 = scalar_select %p26, %s27, %s28
      %p32 = pneg %p26
      %p33 = scmp.eq.s32.totalorder %s17, 1
      %p34 = por %p32, %p33
      %p35 = scmp.ne.s32.totalorder %s27, %s30
      %p36 = scmp.eq.s32.totalorder %s17, 0
      %p37 = por %p35, %p36
      %p38 = scmp.ne.s32.totalorder %s27, %s30
      %p39 = scmp.eq.s32.totalorder %s22, 1
      %p40 = por %p38, %p39
      %p41 = scmp.ne.s32.totalorder %s30, %s31
      %p42 = scmp.eq.s32.totalorder %s22, 0
      %p43 = por %p41, %p42
      %p44 = scmp.ne.s32.totalorder %s30, %s31
      %p45 = scmp.eq.s32.totalorder %s23, 1
      %p46 = por %p44, %p45
      %p48 = scmp.ne.s32.totalorder %s31, %s47
      %p49 = scmp.eq.s32.totalorder %s23, 0
      %p50 = por %p48, %p49
      %s52 = sadd.s32 %s51, 1
      %p55 = scmp.eq.s32.totalorder %s17, 1
      %p56 = scmp.ne.s32.totalorder %s51, %s53
      %p57 = scmp.eq.s32.totalorder %s17, 0
      %p58 = por %p56, %p57
      %p59 = scmp.ne.s32.totalorder %s51, %s53
      %p60 = scmp.eq.s32.totalorder %s22, 1
      %p61 = por %p59, %p60
      %p62 = scmp.ne.s32.totalorder %s53, %s54
      %p63 = scmp.eq.s32.totalorder %s22, 0
      %p64 = por %p62, %p63
      %p65 = scmp.ne.s32.totalorder %s53, %s54
      %p66 = scmp.eq.s32.totalorder %s23, 1
      %p67 = por %p65, %p66
      %p69 = scmp.ne.s32.totalorder %s54, %s68
      %p70 = scmp.eq.s32.totalorder %s23, 0
      %p71 = por %p69, %p70
      %s73 = sadd.s32 %s72, 1
      %p76 = scmp.eq.s32.totalorder %s17, 1
      %p77 = scmp.ne.s32.totalorder %s72, %s74
      %p78 = scmp.eq.s32.totalorder %s17, 0
      %p79 = por %p77, %p78
      %p80 = scmp.ne.s32.totalorder %s72, %s74
      %p81 = scmp.eq.s32.totalorder %s22, 1
      %p82 = por %p80, %p81
      %p83 = scmp.ne.s32.totalorder %s74, %s75
      %p84 = scmp.eq.s32.totalorder %s22, 0
      %p85 = por %p83, %p84
      %p86 = scmp.ne.s32.totalorder %s74, %s75
      %p87 = scmp.eq.s32.totalorder %s23, 1
      %p88 = por %p86, %p87
      %p90 = scmp.ne.s32.totalorder %s75, %s89
      %p91 = scmp.eq.s32.totalorder %s23, 0
      %p92 = por %p90, %p91
      %s94 = sadd.s32 %s93, 1
      %p97 = scmp.eq.s32.totalorder %s17, 1
      %p98 = scmp.ne.s32.totalorder %s93, %s95
      %p99 = scmp.eq.s32.totalorder %s17, 0
      %p100 = por %p98, %p99
      %p101 = scmp.ne.s32.totalorder %s93, %s95
      %p102 = scmp.eq.s32.totalorder %s22, 1
      %p103 = por %p101, %p102
      %p104 = scmp.ne.s32.totalorder %s95, %s96
      %p105 = scmp.eq.s32.totalorder %s22, 0
      %p106 = por %p104, %p105
      %p107 = scmp.ne.s32.totalorder %s95, %s96
      %p108 = scmp.eq.s32.totalorder %s23, 1
      %p109 = por %p107, %p108
      %p111 = scmp.ne.s32.totalorder %s96, %s110
      %p112 = scmp.eq.s32.totalorder %s23, 0
      %p113 = por %p111, %p112
      %s114 = ssub.s32 %s17, %s24
      %p115 = scmp.eq.s32.totalorder %s114, 0
      %s117 = sadd.s32 %s116, 1
      %s118 = scalar_select %p115, %s116, %s117
      %p121 = pneg %p115
      %p122 = scmp.eq.s32.totalorder %s17, 1
      %p123 = por %p121, %p122
      %p124 = scmp.ne.s32.totalorder %s116, %s119
      %p125 = scmp.eq.s32.totalorder %s17, 0
      %p126 = por %p124, %p125
      %p127 = scmp.ne.s32.totalorder %s116, %s119
      %p128 = scmp.eq.s32.totalorder %s22, 1
      %p129 = por %p127, %p128
      %p130 = scmp.ne.s32.totalorder %s119, %s120
      %p131 = scmp.eq.s32.totalorder %s22, 0
      %p132 = por %p130, %p131
      %p133 = scmp.ne.s32.totalorder %s119, %s120
      %p134 = scmp.eq.s32.totalorder %s23, 1
      %p135 = por %p133, %p134
      %p137 = scmp.ne.s32.totalorder %s120, %s136
      %p138 = scmp.eq.s32.totalorder %s23, 0
      %p139 = por %p137, %p138
      %s140 = ssub.s32 %s17, %s24
      %p141 = scmp.eq.s32.totalorder %s140, 0
      %s143 = sadd.s32 %s142, 1
      %s144 = scalar_select %p141, %s142, %s143
      %p147 = pneg %p141
      %p148 = scmp.eq.s32.totalorder %s17, 1
      %p149 = por %p147, %p148
      %p150 = scmp.ne.s32.totalorder %s142, %s145
      %p151 = scmp.eq.s32.totalorder %s17, 0
      %p152 = por %p150, %p151
      %p153 = scmp.ne.s32.totalorder %s142, %s145
      %p154 = scmp.eq.s32.totalorder %s22, 1
      %p155 = por %p153, %p154
      %p156 = scmp.ne.s32.totalorder %s145, %s146
      %p157 = scmp.eq.s32.totalorder %s22, 0
      %p158 = por %p156, %p157
      %p159 = scmp.ne.s32.totalorder %s145, %s146
      %p160 = scmp.eq.s32.totalorder %s23, 1
      %p161 = por %p159, %p160
      %p163 = scmp.ne.s32.totalorder %s146, %s162
      %p164 = scmp.eq.s32.totalorder %s23, 0
      %p165 = por %p163, %p164
      %p166 = scmp.le.s32.totalorder 1, %s17
      %p167 = scmp.lt.s32.totalorder %s17, 3
      %p168 = pnand %p166, %p167
      %p169 = pneg %p168
      // Predicated region
      $region9: #{tpu_custom_call.1} parent=5 // pred_check
        _
      $region10: #{tpu_custom_call.1} parent=5 // pred_check_branch
        %171 = sbr.rel (%p168) target = $region12
      $region11: #{tpu_custom_call.1} parent=5 // pred_region
        %s172 = ssub.s32 %s17, 1
        // Predicated region
        $region13: #{tpu_custom_call.1} parent=11 // pred_check
          %p173 = pneg %p64
        $region14: #{tpu_custom_call.1} parent=11 // pred_check_branch
          %175 = sbr.rel (%p173) target = $region16
        $region15: #{tpu_custom_call.1} parent=11 // pred_region
          _
        $region16: #{tpu_custom_call.1} parent=11 // pred_fallthru
          _
        // Predicated region
        $region17: #{tpu_custom_call.1} parent=11 // pred_check
          %p176 = pneg %p85
        $region18: #{tpu_custom_call.1} parent=11 // pred_check_branch
          %178 = sbr.rel (%p176) target = $region20
        $region19: #{tpu_custom_call.1} parent=11 // pred_region
          _
        $region20: #{tpu_custom_call.1} parent=11 // pred_fallthru
          _
        // Predicated region
        $region21: #{tpu_custom_call.1} parent=11 // pred_check
          %p179 = pneg %p106
        $region22: #{tpu_custom_call.1} parent=11 // pred_check_branch
          %181 = sbr.rel (%p179) target = $region24
        $region23: #{tpu_custom_call.1} parent=11 // pred_region
          _
        $region24: #{tpu_custom_call.1} parent=11 // pred_fallthru
          _
      $region12: #{tpu_custom_call.1} parent=5 // pred_fallthru
        _
      %p182 = scmp.lt.s32.totalorder %s17, 2
      // Predicated region
      $region25: #{tpu_custom_call.1} parent=5 // pred_check
        %p183 = pneg %p182
      $region26: #{tpu_custom_call.1} parent=5 // pred_check_branch
        %185 = sbr.rel (%p183) target = $region28
      $region27: #{tpu_custom_call.1} parent=5 // pred_region
        // Predicated region
        $region29: #{tpu_custom_call.1} parent=27 // pred_check
          %p186 = pneg %p37
        $region30: #{tpu_custom_call.1} parent=27 // pred_check_branch
          %188 = sbr.rel (%p186) target = $region32
        $region31: #{tpu_custom_call.1} parent=27 // pred_region
          %s189 = sand.u32 %s27, 1
          %s190 = scalar_lea.sflag [#allocation3], %s189
          %s191 = sand.u32 %s27, 1
          %s192 = smul.addr %s191, 40
          %s193 = scalar_lea.vmem [#allocation2], %s192
          %s195 = ssub.s32 640, 640
          %196 = vsyncadd %s190, %s195
          %s197 = smul.addr %s17, 10
          %s198 = smul.addr %s197, 64
          %s199 = scalar_lea.hbm %s0, %s198
          %s200 = sshll.u32 %s193, 4
          %s201 = int_to_ptr.vmem [resolvable:$true] %s200
          %206 = dma.hbm_to_vmem [thread:$0]  %s199, 640, %s201, %s190, 128, 128, 8
        $region32: #{tpu_custom_call.1} parent=27 // pred_fallthru
          _
        // Predicated region
        $region33: #{tpu_custom_call.1} parent=27 // pred_check
          %p207 = pneg %p126
        $region34: #{tpu_custom_call.1} parent=27 // pred_check_branch
          %209 = sbr.rel (%p207) target = $region36
        $region35: #{tpu_custom_call.1} parent=27 // pred_region
          %p210 = scmp.lt.s32.totalorder %s17, 1
          %s211 = scalar_select %p210, %s17, 1
          %s212 = smul.addr %s211, 2
          %s213 = scalar_lea.vmem %s4, %s212
        $region36: #{tpu_custom_call.1} parent=27 // pred_fallthru
          _
      $region28: #{tpu_custom_call.1} parent=5 // pred_fallthru
        _
      %p214 = scmp.le.s32.totalorder 1, %s17
      %p215 = scmp.lt.s32.totalorder %s17, 3
      %p216 = pnand %p214, %p215
      %p217 = pneg %p216
      // Predicated region
      $region37: #{tpu_custom_call.1} parent=5 // pred_check
        _
      $region38: #{tpu_custom_call.1} parent=5 // pred_check_branch
        %219 = sbr.rel (%p216) target = $region40
      $region39: #{tpu_custom_call.1} parent=5 // pred_region
        %s220 = ssub.s32 %s17, 1
        %s221 = sand.u32 %s30, 1
        %s222 = scalar_lea.sflag [#allocation3], %s221
        %s223 = sand.u32 %s30, 1
        %s224 = smul.addr %s223, 40
        %s225 = scalar_lea.vmem [#allocation2], %s224
        // Predicated region
        $region41: #{tpu_custom_call.1} parent=39 // pred_check
          %p226 = pneg %p43
        $region42: #{tpu_custom_call.1} parent=39 // pred_check_branch
          %228 = sbr.rel (%p226) target = $region44
        $region43: #{tpu_custom_call.1} parent=39 // pred_region
          %229 = dma.done %s222, 640
        $region44: #{tpu_custom_call.1} parent=39 // pred_fallthru
          _
        %s230 = sand.u32 %s30, 1
        %s231 = scalar_lea.sflag [#allocation3], %s230
        %s232 = sand.u32 %s30, 1
        %s233 = smul.addr %s232, 40
        %s234 = scalar_lea.vmem [#allocation2], %s233
        %p235 = pneg %p43
        %p236 = pneg %p40
        %p237 = pneg %p64
        %p238 = pneg %p61
        %p239 = pneg %p85
        %p240 = pneg %p82
        %p241 = pneg %p106
        %p242 = pneg %p103
        %p243 = scmp.lt.s32.totalorder %s22, 1
        %s244 = scalar_select %p243, %s22, 1
        %s245 = smul.addr %s244, 2
        %s246 = scalar_lea.vmem %s4, %s245
        %p247 = pneg %p132
        %p248 = pneg %p129
        %p249 = pneg %p158
        %p250 = pneg %p155
        %s251 = sand.u32 %s145, 1
        %s252 = scalar_lea.sflag [#allocation4], %s251
        %s253 = sand.u32 %s145, 1
        %s254 = smul.addr %s253, 16
        %s255 = scalar_lea.vmem [#allocation5], %s254
        %p256 = scmp.lt.s32.totalorder %s22, 1
        %s257 = scalar_select %p256, %s22, 1
        %s258 = smul.addr %s257, 2
        %s259 = scalar_lea.vmem %s4, %s258
        %v261 = vld [vmem:[%s1] sm:$0xf]
        %v262 = vld [vmem:[%s225] sm:$0xff]
        %v263 = vld [vmem:[%s225 + $0x8] sm:$0xff]
        %v264 = vld [vmem:[%s225 + $0x10] sm:$0xff]
        %v265 = vld [vmem:[%s225 + $0x18] sm:$0xff]
        %v266 = vld [vmem:[%s225 + $0x20] sm:$0xff]
        %v267 = vld [vmem:[%s2] sm:$0xf]
        %v268 = vld [vmem:[%s259] sm:$0x3]
        %v269 = vld [vmem:[%s3] sm:$0xff]
        %vm270 = vcmask 31744
        %v272 = vsel %vm270, %v267, 0
        %vm274 = vcmask 1041408
        %v276 = vsel %vm274, %v268, 0
        %278 = vmatprep.subr.bf16.mxu0 0
        %279 = vmatpush1.bf16.msra.mxu0 %v276
        %280 = vmatprep.subr.bf16.mxu0 0
        %281 = vmatpush1.bf16.msra.mxu0 0
        %282 = vmatprep.subr.bf16.mxu0 0
        %283 = vmatpush1.bf16.msra.mxu0 0
        %284 = vmatprep.subr.bf16.mxu0 0
        %285 = vmatpush1.bf16.msra.mxu0 0
        %286 = vmatprep.subr.bf16.mxu0 0
        %287 = vmatpush1.bf16.msra.mxu0 0
        %288 = vmatprep.subr.bf16.mxu0 0
        %289 = vmatpush1.bf16.msra.mxu0 0
        %290 = vmatprep.subr.bf16.mxu0 0
        %291 = vmatpush1.bf16.msra.mxu0 0
        %292 = vmatprep.subr.bf16.mxu0 0
        %293 = vmatpush1.bf16.msra.mxu0 0
        %294 = vmatprep.subr.bf16.mxu0 0
        %295 = vmatpush1.bf16.msra.mxu0 0
        %296 = vmatprep.subr.bf16.mxu0 0
        %297 = vmatpush1.bf16.msra.mxu0 0
        %298 = vmatprep.subr.bf16.mxu0 0
        %299 = vmatpush1.bf16.msra.mxu0 0
        %300 = vmatprep.subr.bf16.mxu0 0
        %301 = vmatpush1.bf16.msra.mxu0 0
        %302 = vmatprep.subr.bf16.mxu0 0
        %303 = vmatpush1.bf16.msra.mxu0 0
        %304 = vmatprep.subr.bf16.mxu0 0
        %305 = vmatpush1.bf16.msra.mxu0 0
        %306 = vmatprep.subr.bf16.mxu0 0
        %307 = vmatpush1.bf16.msra.mxu0 0
        %308 = vmatprep.subr.bf16.mxu0 0
        %309 = vmatpush1.bf16.msra.mxu0 0
        %310 = vmatprep.mubr.bf16.mxu0 0
        %311 = vmatmul.mubr.bf16.gmra.mrb[0].mxu0 %v272
        %v312 = vpop.f32.mrb[0].mxu0
        %v313 = vadd.f32 %v269, %v312
        %v314 = vpop.f32.mrb[0].mxu0
        %v315 = vpop.f32.mrb[0].mxu0
        %v316 = vpop.f32.mrb[0].mxu0
        %317 = vdwg.mxu0
        %v318 = vmax.f32 %v313, 0.0
        %320 = vset.pattern.permute.xlu0 0
        %321 = vperm.xlu0 %320, %v318
        %v322 = vpop.permute.xlu0 %321
        %v329 = vunpack.c.l.b16 %v262
        %v330 = vunpack.c.h.b16 %v262
        %v331 = vunpack.c.l.b16 %v263
        %v332 = vunpack.c.h.b16 %v263
        %v333 = vunpack.c.l.b16 %v264
        %v334 = vunpack.c.h.b16 %v264
        %v335 = vunpack.c.l.b16 %v265
        %v336 = vunpack.c.h.b16 %v265
        %v337 = vunpack.c.l.b16 %v266
        %v338 = vunpack.c.h.b16 %v266
        %v339 = vpack.c.b16 %v331, %v329
        %v340 = vpack.c.b16 %v332, %v330
        %v341 = vpack.c.b16 %v335, %v333
        %v342 = vpack.c.b16 %v336, %v334
        %v343 = vpack.c.b16 %v337, %v337
        %v344 = vpack.c.b16 %v338, %v338
        %vm349 = vcmask 326656
        %v351 = vsel %vm349, %v261, 0
        %vm353 = vcmask 1043456
        %v355 = vsel %vm353, %v343, 0
        %v358 = vsel %vm353, %v344, 0
        %360 = vmatprep.subr.bf16.mxu0 %v340
        %361 = vmatpush1.bf16.msra.mxu0 %v339
        %362 = vmatprep.subr.bf16.mxu0 %v342
        %363 = vmatpush1.bf16.msra.mxu0 %v341
        %364 = vmatprep.subr.bf16.mxu0 %v358
        %365 = vmatpush1.bf16.msra.mxu0 %v355
        %366 = vmatprep.subr.bf16.mxu0 0
        %367 = vmatpush1.bf16.msra.mxu0 0
        %368 = vmatprep.subr.bf16.mxu0 0
        %369 = vmatpush1.bf16.msra.mxu0 0
        %370 = vmatprep.subr.bf16.mxu0 0
        %371 = vmatpush1.bf16.msra.mxu0 0
        %372 = vmatprep.subr.bf16.mxu0 0
        %373 = vmatpush1.bf16.msra.mxu0 0
        %374 = vmatprep.subr.bf16.mxu0 0
        %375 = vmatpush1.bf16.msra.mxu0 0
        %376 = vmatprep.subr.bf16.mxu0 0
        %377 = vmatpush1.bf16.msra.mxu0 0
        %378 = vmatprep.subr.bf16.mxu0 0
        %379 = vmatpush1.bf16.msra.mxu0 0
        %380 = vmatprep.subr.bf16.mxu0 0
        %381 = vmatpush1.bf16.msra.mxu0 0
        %382 = vmatprep.subr.bf16.mxu0 0
        %383 = vmatpush1.bf16.msra.mxu0 0
        %384 = vmatprep.subr.bf16.mxu0 0
        %385 = vmatpush1.bf16.msra.mxu0 0
        %386 = vmatprep.subr.bf16.mxu0 0
        %387 = vmatpush1.bf16.msra.mxu0 0
        %388 = vmatprep.subr.bf16.mxu0 0
        %389 = vmatpush1.bf16.msra.mxu0 0
        %390 = vmatprep.subr.bf16.mxu0 0
        %391 = vmatpush1.bf16.msra.mxu0 0
        %392 = vmatprep.mubr.bf16.mxu0 0
        %393 = vmatmul.mubr.bf16.gmra.mrb[0].mxu0 %v351
        %v394 = vpop.f32.mrb[0].mxu0
        %v395 = vadd.f32 %v322, %v394
        %v396 = vpop.f32.mrb[0].mxu0
        %v397 = vadd.f32 %v322, %v396
        %v398 = vpop.f32.mrb[0].mxu0
        %v399 = vpop.f32.mrb[0].mxu0
        %400 = vdwg.mxu0
        %401 = vst [vmem:[%s255] sm:$0xff] %v395
        %402 = vst [vmem:[%s255 + $0x8] sm:$0xff] %v397
        %s403 = sand.u32 %s145, 1
        %s404 = scalar_lea.sflag [#allocation4], %s403
        %s405 = sand.u32 %s145, 1
        %s406 = smul.addr %s405, 16
        %s407 = scalar_lea.vmem [#allocation5], %s406
        // Predicated region
        $region45: #{tpu_custom_call.1} parent=39 // pred_check
          %p408 = pneg %p155
        $region46: #{tpu_custom_call.1} parent=39 // pred_check_branch
          %410 = sbr.rel (%p408) target = $region48
        $region47: #{tpu_custom_call.1} parent=39 // pred_region
          %s412 = ssub.s32 256, 256
          %413 = vsyncadd %s404, %s412
          %s414 = smul.addr %s22, 2
          %s415 = smul.addr %s414, 128
          %s416 = scalar_lea.hbm %s5, %s415
          %s418 = sshll.u32 %s407, 4
          %s419 = int_to_ptr.vmem [resolvable:$true] %s418
          %421 = dma.vmem_to_hbm [thread:$0]  %s419, 256, %s416, %s404
        $region48: #{tpu_custom_call.1} parent=39 // pred_fallthru
          _
      $region40: #{tpu_custom_call.1} parent=5 // pred_fallthru
        _
      %p422 = scmp.le.s32.totalorder 2, %s17
      // Predicated region
      $region49: #{tpu_custom_call.1} parent=5 // pred_check
        %p423 = pneg %p422
      $region50: #{tpu_custom_call.1} parent=5 // pred_check_branch
        %425 = sbr.rel (%p423) target = $region52
      $region51: #{tpu_custom_call.1} parent=5 // pred_region
        %s426 = ssub.s32 %s17, 2
        // Predicated region
        $region53: #{tpu_custom_call.1} parent=51 // pred_check
          %p427 = pneg %p161
        $region54: #{tpu_custom_call.1} parent=51 // pred_check_branch
          %429 = sbr.rel (%p427) target = $region56
        $region55: #{tpu_custom_call.1} parent=51 // pred_region
          %s430 = sand.u32 %s146, 1
          %s431 = scalar_lea.sflag [#allocation4], %s430
          %s432 = sand.u32 %s146, 1
          %s433 = smul.addr %s432, 16
          %s434 = scalar_lea.vmem [#allocation5], %s433
          %435 = dma.done %s431, 256
        $region56: #{tpu_custom_call.1} parent=51 // pred_fallthru
          _
      $region52: #{tpu_custom_call.1} parent=5 // pred_fallthru
        _
    $region6: #{tpu_custom_call.1} parent=1 // loop_footer
      %s21 = sadd.s32 1, %s17
    $region7: #{tpu_custom_call.1} parent=1 // loop_footer_branch
      %16 = sbr.rel target = $region3
    $region8: #{tpu_custom_call.1} parent=1 // loop_exit
      _
    %436 = vsyncpa [#allocation3], 1
    %s437 = scalar_lea.sflag [#allocation3], 1
    %438 = vsyncpa %s437, 1
    %439 = vsyncpa [#allocation4], 1
    %s440 = scalar_lea.sflag [#allocation4], 1
    %441 = vsyncpa %s440, 1

</llo_original>
